<compile_context>
chip_gen: v7x
topology: tpu7x:2x2x1
jax: 0.10.0
libtpu: 0.0.40
codegen_flags: <defaults>
</compile_context>

<pallas_src>
import jax
import jax.numpy as jnp
from jax import lax
from jax.experimental import pallas as pl
from jax.experimental.pallas import tpu as pltpu

# --- model hyper-parameters (small, consistent with the module) -------------
N            = 2      # batch
IN_CH        = 32     # feature channels coming into the head
NUM_F        = 16     # num_f_maps
NUM_CLASSES  = 8
NUM_LAYERS   = 3      # dilations 1, 2, 4
SAMPLE_RATE  = 2
T_FULL       = 16     # temporal length of the mask
T_FEAT       = T_FULL // SAMPLE_RATE       # temporal length of the features
PACKED_T     = N * T_FEAT                  # batch flattened onto the lane axis
LANES        = 128 * pl.cdiv(PACKED_T, 128)  # lane-dense (multiple of 128)

# Set to jnp.bfloat16 on v6e/v7x for MXU-bound shapes (keep f32 accumulation).
MXU_DTYPE = jnp.float32


def _mm(w, x):
    return jnp.dot(w.astype(MXU_DTYPE), x.astype(MXU_DTYPE),
                   preferred_element_type=jnp.float32)


# --- Pallas kernel: whole batch in one invocation ----------------------------
def _tcn_kernel(feat_ref, mask_ref,
                w_in_ref, b_in_ref,
                w_dilf_ref, b_dil_ref,
                w_pw_ref, b_pw_ref,
                w_out_ref, b_out_ref,
                out_ref):
    x = feat_ref[...]                    # (IN_CH, LANES)  lane = batch*time (padded)
    m = mask_ref[...]                    # (1, LANES)      broadcasts over channels

    # input 1x1 conv: channels matmul on the MXU
    h = _mm(w_in_ref[...], x) + b_in_ref[...]          # (NUM_F, LANES)

    # per-lane "time within sequence" index; sequences are T_FEAT lanes long,
    # so masking on (lane % T_FEAT) reproduces zero padding at every sequence
    # edge (including the batch boundary and the 128-lane padding region).
    t_mod = lax.broadcasted_iota(jnp.int32, (NUM_F, LANES), 1) % T_FEAT

    # dilated residual layers (statically unrolled; dropout is identity at eval)
    for l in range(NUM_LAYERS):
        d = 2 ** l
        # left / right neighbors of the dilated k=3 conv via XLU rotations
        h_prev = jnp.where(t_mod >= d,
                           pltpu.roll(h, d, axis=1), 0.0)           # h[t-d]
        h_next = jnp.where(t_mod < T_FEAT - d,
                           pltpu.roll(h, LANES - d, axis=1), 0.0)   # h[t+d]
        xin = jnp.concatenate([h_prev, h, h_next], axis=0)          # (3*NUM_F, LANES)

        y = _mm(w_dilf_ref[l], xin) + b_dil_ref[l]      # fused K=3*NUM_F matmul
        y = jnp.maximum(y, 0.0)                         # ReLU (VPU)
        y = _mm(w_pw_ref[l], y) + b_pw_ref[l]           # 1x1 conv
        h = (h + y) * m                                 # residual + mask

    out_ref[...] = (_mm(w_out_ref[...], h) + b_out_ref[...]) * m    # (K, LANES)


def _full_spec(shape):
    zeros = (0,) * len(shape)
    return pl.BlockSpec(shape, lambda i, z=zeros: z)


def _head_pallas(feat_packed, mask_packed, p):
    """feat_packed: (IN_CH, LANES), mask_packed: (1, LANES) -> (K, LANES)."""
    # fold the 3 conv taps into a single (NUM_F, 3*NUM_F) matrix per layer
    w_dilf = jnp.transpose(p['w_dil'], (0, 2, 1, 3)).reshape(
        NUM_LAYERS, NUM_F, 3 * NUM_F)

    args = (feat_packed, mask_packed,
            p['w_in'], p['b_in'], w_dilf, p['b_dil'],
            p['w_pw'], p['b_pw'], p['w_out'], p['b_out'])

    return pl.pallas_call(
        _tcn_kernel,
        out_shape=jax.ShapeDtypeStruct((NUM_CLASSES, LANES), jnp.float32),
        grid_spec=pltpu.PrefetchScalarGridSpec(
            num_scalar_prefetch=0,
            grid=(1,),                               # single step: weights staged once
            in_specs=[_full_spec(a.shape) for a in args],
            out_specs=_full_spec((NUM_CLASSES, LANES)),
        ),
        compiler_params=pltpu.CompilerParams(dimension_semantics=("arbitrary",)),
    )(*args)


# --- FeatureSegmentation3D.forward (backbone=None, neck=None) ---------------
def feature_segmentation3d_forward(input_data, params):
    masks = input_data['masks']                     # (N, T_FULL)
    feature = input_data['feature']                 # (N, IN_CH, T_FEAT)
    masks = masks[:, None, :]                       # masks.unsqueeze(1) -> (N, 1, T_FULL)
    # backbone is None -> feature passes through; neck is None -> seg_feature = feature
    # head: internally uses mask[:, :, ::sample_rate] on the feature time grid
    mask_sampled = masks[:, :, ::SAMPLE_RATE]       # (N, 1, T_FEAT)

    # lane-dense packing: batch flattened onto the time/lane axis, padded to 128
    feat_packed = jnp.transpose(feature, (1, 0, 2)).reshape(IN_CH, PACKED_T)
    feat_packed = jnp.pad(feat_packed, ((0, 0), (0, LANES - PACKED_T)))
    mask_packed = jnp.transpose(mask_sampled, (1, 0, 2)).reshape(1, PACKED_T)
    mask_packed = jnp.pad(mask_packed, ((0, 0), (0, LANES - PACKED_T)))

    out_packed = _head_pallas(feat_packed, mask_packed, params)     # (K, LANES)

    head_out = out_packed[:, :PACKED_T].reshape(NUM_CLASSES, N, T_FEAT)
    head_out = jnp.transpose(head_out, (1, 0, 2))                   # (N, K, T_FEAT)

    # F.interpolate(..., scale_factor=sample_rate, mode="nearest") on time axis.
    # TODO(synk): could be fused into the kernel's output store; left as a tiny
    # fused XLA repeat at these shapes.
    head_score = jnp.repeat(head_out, SAMPLE_RATE, axis=-1)         # (N, K, T_FULL)
    head_score = head_score[None]                                   # (1, N, K, T_FULL)
    return {'output': head_score}


# --- deterministic parameter init (shapes from the head's __init__) ---------
def init_params(key):
    ks = jax.random.split(key, 8)
    f32 = jnp.float32
    return {
        'w_in':  0.1 * jax.random.normal(ks[0], (NUM_F, IN_CH), f32),
        'b_in':  0.01 * jax.random.normal(ks[1], (NUM_F, 1), f32),
        'w_dil': 0.1 * jax.random.normal(ks[2], (NUM_LAYERS, 3, NUM_F, NUM_F), f32),
        'b_dil': 0.01 * jax.random.normal(ks[3], (NUM_LAYERS, NUM_F, 1), f32),
        'w_pw':  0.1 * jax.random.normal(ks[4], (NUM_LAYERS, NUM_F, NUM_F), f32),
        'b_pw':  0.01 * jax.random.normal(ks[5], (NUM_LAYERS, NUM_F, 1), f32),
        'w_out': 0.1 * jax.random.normal(ks[6], (NUM_CLASSES, NUM_F), f32),
        'b_out': 0.01 * jax.random.normal(ks[7], (NUM_CLASSES, 1), f32),
    }


# --- pure-JAX reference (same math, no Pallas) for a correctness check ------
def _shift_right_ref(x, d):
    if d == 0:
        return x
    z = jnp.zeros((x.shape[0], d), x.dtype)
    return jnp.concatenate([z, x[:, : x.shape[1] - d]], axis=1)


def _shift_left_ref(x, d):
    if d == 0:
        return x
    z = jnp.zeros((x.shape[0], d), x.dtype)
    return jnp.concatenate([x[:, d:], z], axis=1)


def _ref_forward(input_data, p):
    masks = input_data['masks'][:, None, :]
    feature = input_data['feature']
    m_s = masks[:, :, ::SAMPLE_RATE]

    def one(x, m):
        h = p['w_in'] @ x + p['b_in']
        for l in range(NUM_LAYERS):
            d = 2 ** l
            w = p['w_dil'][l]
            y = (w[0] @ _shift_right_ref(h, d) + w[1] @ h
                 + w[2] @ _shift_left_ref(h, d) + p['b_dil'][l])
            y = jnp.maximum(y, 0.0)
            y = p['w_pw'][l] @ y + p['b_pw'][l]
            h = (h + y) * m
        return (p['w_out'] @ h + p['b_out']) * m

    out = jax.vmap(one)(feature, m_s)
    return jnp.repeat(out, SAMPLE_RATE, axis=-1)[None]


if __name__ == "__main__":
    key = jax.random.PRNGKey(0)
    k_feat, k_param = jax.random.split(key)

    feature = jax.random.normal(k_feat, (N, IN_CH, T_FEAT), jnp.float32)
    # mask: first sequence fully valid, second padded after 10 frames
    masks = jnp.ones((N, T_FULL), jnp.float32)
    masks = masks.at[1, 10:].set(0.0)

    params = init_params(k_param)
    input_data = {'feature': feature, 'masks': masks}

    result = feature_segmentation3d_forward(input_data, params)
    out = jax.block_until_ready(result['output'])
    assert out.shape == (1, N, NUM_CLASSES, T_FULL), out.shape

    ref = jax.block_until_ready(_ref_forward(input_data, params))
    assert jnp.allclose(out, ref, atol=1e-4, rtol=1e-4), "mismatch vs JAX reference"

    print("KERNEL_OK")
</pallas_src>

<mosaic_0001>
module attributes {stable_mosaic.version = 11 : i64} {
  func.func @_tcn_kernel(%arg0: i32, %arg1: memref<32x128xf32, #tpu.memory_space<vmem>>, %arg2: memref<1x128xf32, #tpu.memory_space<vmem>>, %arg3: memref<16x32xf32, #tpu.memory_space<vmem>>, %arg4: memref<16x1xf32, #tpu.memory_space<vmem>>, %arg5: memref<3x16x48xf32, #tpu.memory_space<vmem>>, %arg6: memref<3x16x1xf32, #tpu.memory_space<vmem>>, %arg7: memref<3x16x16xf32, #tpu.memory_space<vmem>>, %arg8: memref<3x16x1xf32, #tpu.memory_space<vmem>>, %arg9: memref<8x16xf32, #tpu.memory_space<vmem>>, %arg10: memref<8x1xf32, #tpu.memory_space<vmem>>, %arg11: memref<8x128xf32, #tpu.memory_space<vmem>>) attributes {dimension_semantics = [#tpu.dimension_semantics<arbitrary>], iteration_bounds = array<i64: 1>, scalar_prefetch = 0 : i64, scratch_operands = 0 : i64, tpu.core_type = #tpu.core_type<tc>, window_params = [{pipeline_mode = #tpu.pipeline_mode<synchronous>, transform_indices = @transform_0, window_bounds = array<i64: 32, 128>}, {pipeline_mode = #tpu.pipeline_mode<synchronous>, transform_indices = @transform_1, window_bounds = array<i64: 1, 128>}, {pipeline_mode = #tpu.pipeline_mode<synchronous>, transform_indices = @transform_2, window_bounds = array<i64: 16, 32>}, {pipeline_mode = #tpu.pipeline_mode<synchronous>, transform_indices = @transform_3, window_bounds = array<i64: 16, 1>}, {pipeline_mode = #tpu.pipeline_mode<synchronous>, transform_indices = @transform_4, window_bounds = array<i64: 3, 16, 48>}, {pipeline_mode = #tpu.pipeline_mode<synchronous>, transform_indices = @transform_5, window_bounds = array<i64: 3, 16, 1>}, {pipeline_mode = #tpu.pipeline_mode<synchronous>, transform_indices = @transform_6, window_bounds = array<i64: 3, 16, 16>}, {pipeline_mode = #tpu.pipeline_mode<synchronous>, transform_indices = @transform_7, window_bounds = array<i64: 3, 16, 1>}, {pipeline_mode = #tpu.pipeline_mode<synchronous>, transform_indices = @transform_8, window_bounds = array<i64: 8, 16>}, {pipeline_mode = #tpu.pipeline_mode<synchronous>, transform_indices = @transform_9, window_bounds = array<i64: 8, 1>}, {pipeline_mode = #tpu.pipeline_mode<synchronous>, transform_indices = @transform_10, window_bounds = array<i64: 8, 128>}]} {
    %c0 = arith.constant 0 : index
    %c0_0 = arith.constant 0 : index
    %0 = vector.load %arg1[%c0, %c0_0] : memref<32x128xf32, #tpu.memory_space<vmem>>, vector<32x128xf32>
    %c0_1 = arith.constant 0 : index
    %c0_2 = arith.constant 0 : index
    %1 = vector.load %arg2[%c0_1, %c0_2] : memref<1x128xf32, #tpu.memory_space<vmem>>, vector<1x128xf32>
    %c0_3 = arith.constant 0 : index
    %c0_4 = arith.constant 0 : index
    %2 = vector.load %arg3[%c0_3, %c0_4] : memref<16x32xf32, #tpu.memory_space<vmem>>, vector<16x32xf32>
    %cst = arith.constant dense<0.000000e+00> : vector<16x128xf32>
    %3 = tpu.matmul %2, %0, %cst {dimension_numbers = #tpu.dot_dimension_numbers<[1], [0], [0], [1], [0, 0, 1, 1], [], []>} : vector<16x32xf32>, vector<32x128xf32>, vector<16x128xf32> -> vector<16x128xf32>
    %c0_5 = arith.constant 0 : index
    %c0_6 = arith.constant 0 : index
    %4 = vector.load %arg4[%c0_5, %c0_6] : memref<16x1xf32, #tpu.memory_space<vmem>>, vector<16x1xf32>
    %5 = vector.broadcast %4 : vector<16x1xf32> to vector<16x128xf32>
    %6 = arith.addf %3, %5 : vector<16x128xf32>
    %7 = tpu.iota {dimensions = array<i32: 1>} : vector<16x128xi32>
    %c8_i32 = arith.constant 8 : i32
    %c0_i32 = arith.constant 0 : i32
    %8 = arith.cmpi eq, %c8_i32, %c0_i32 : i32
    %c1_i32 = arith.constant 1 : i32
    %9 = arith.select %8, %c1_i32, %c8_i32 : i32
    %10 = vector.broadcast %9 : i32 to vector<16x128xi32>
    %11 = arith.remsi %7, %10 : vector<16x128xi32>
    %c0_i32_7 = arith.constant 0 : i32
    %12 = vector.broadcast %c0_i32_7 : i32 to vector<16x128xi32>
    %13 = arith.cmpi ne, %11, %12 : vector<16x128xi32>
    %c0_i32_8 = arith.constant 0 : i32
    %14 = vector.broadcast %c0_i32_8 : i32 to vector<16x128xi32>
    %15 = arith.cmpi slt, %11, %14 : vector<16x128xi32>
    %c0_i32_9 = arith.constant 0 : i32
    %16 = arith.cmpi slt, %9, %c0_i32_9 : i32
    %17 = vector.broadcast %16 : i1 to vector<16x128xi1>
    %18 = vector.broadcast %17 : vector<16x128xi1> to vector<16x128xi1>
    %19 = arith.xori %15, %18 : vector<16x128xi1>
    %20 = arith.andi %19, %13 : vector<16x128xi1>
    %21 = vector.broadcast %9 : i32 to vector<16x128xi32>
    %22 = arith.addi %11, %21 : vector<16x128xi32>
    %23 = arith.select %20, %22, %11 : vector<16x128xi1>, vector<16x128xi32>
    %c1_i32_10 = arith.constant 1 : i32
    %24 = vector.broadcast %c1_i32_10 : i32 to vector<16x128xi32>
    %25 = arith.cmpi sge, %23, %24 : vector<16x128xi32>
    %c1_i32_11 = arith.constant 1 : i32
    %26 = tpu.dynamic_rotate %6 by %c1_i32_11 dim 1 : vector<16x128xf32>, i32 -> vector<16x128xf32>
    %cst_12 = arith.constant 0.000000e+00 : f32
    %27 = vector.broadcast %cst_12 : f32 to vector<16x128xf32>
    %28 = arith.select %25, %26, %27 : vector<16x128xi1>, vector<16x128xf32>
    %c7_i32 = arith.constant 7 : i32
    %29 = vector.broadcast %c7_i32 : i32 to vector<16x128xi32>
    %30 = arith.cmpi slt, %23, %29 : vector<16x128xi32>
    %c127_i32 = arith.constant 127 : i32
    %31 = tpu.dynamic_rotate %6 by %c127_i32 dim 1 : vector<16x128xf32>, i32 -> vector<16x128xf32>
    %cst_13 = arith.constant 0.000000e+00 : f32
    %32 = vector.broadcast %cst_13 : f32 to vector<16x128xf32>
    %33 = arith.select %30, %31, %32 : vector<16x128xi1>, vector<16x128xf32>
    %34 = tpu.concatenate %28, %6, %33 in 0 : vector<16x128xf32>, vector<16x128xf32>, vector<16x128xf32> -> vector<48x128xf32>
    %c0_14 = arith.constant 0 : index
    %c0_15 = arith.constant 0 : index
    %c0_16 = arith.constant 0 : index
    %35 = vector.load %arg5[%c0_14, %c0_15, %c0_16] : memref<3x16x48xf32, #tpu.memory_space<vmem>>, vector<1x16x48xf32>
    %36 = vector.shape_cast %35 : vector<1x16x48xf32> to vector<16x48xf32>
    %cst_17 = arith.constant dense<0.000000e+00> : vector<16x128xf32>
    %37 = tpu.matmul %36, %34, %cst_17 {dimension_numbers = #tpu.dot_dimension_numbers<[1], [0], [0], [1], [0, 0, 1, 1], [], []>} : vector<16x48xf32>, vector<48x128xf32>, vector<16x128xf32> -> vector<16x128xf32>
    %c0_18 = arith.constant 0 : index
    %c0_19 = arith.constant 0 : index
    %c0_20 = arith.constant 0 : index
    %38 = vector.load %arg6[%c0_18, %c0_19, %c0_20] : memref<3x16x1xf32, #tpu.memory_space<vmem>>, vector<1x16x1xf32>
    %39 = vector.shape_cast %38 : vector<1x16x1xf32> to vector<16x1xf32>
    %40 = vector.broadcast %39 : vector<16x1xf32> to vector<16x128xf32>
    %41 = arith.addf %37, %40 : vector<16x128xf32>
    %cst_21 = arith.constant 0.000000e+00 : f32
    %42 = vector.broadcast %cst_21 : f32 to vector<16x128xf32>
    %43 = arith.maximumf %41, %42 : vector<16x128xf32>
    %c0_22 = arith.constant 0 : index
    %c0_23 = arith.constant 0 : index
    %c0_24 = arith.constant 0 : index
    %44 = vector.load %arg7[%c0_22, %c0_23, %c0_24] : memref<3x16x16xf32, #tpu.memory_space<vmem>>, vector<1x16x16xf32>
    %45 = vector.shape_cast %44 : vector<1x16x16xf32> to vector<16x16xf32>
    %cst_25 = arith.constant dense<0.000000e+00> : vector<16x128xf32>
    %46 = tpu.matmul %45, %43, %cst_25 {dimension_numbers = #tpu.dot_dimension_numbers<[1], [0], [0], [1], [0, 0, 1, 1], [], []>} : vector<16x16xf32>, vector<16x128xf32>, vector<16x128xf32> -> vector<16x128xf32>
    %c0_26 = arith.constant 0 : index
    %c0_27 = arith.constant 0 : index
    %c0_28 = arith.constant 0 : index
    %47 = vector.load %arg8[%c0_26, %c0_27, %c0_28] : memref<3x16x1xf32, #tpu.memory_space<vmem>>, vector<1x16x1xf32>
    %48 = vector.shape_cast %47 : vector<1x16x1xf32> to vector<16x1xf32>
    %49 = vector.broadcast %48 : vector<16x1xf32> to vector<16x128xf32>
    %50 = arith.addf %46, %49 : vector<16x128xf32>
    %51 = arith.addf %6, %50 : vector<16x128xf32>
    %52 = vector.broadcast %1 : vector<1x128xf32> to vector<16x128xf32>
    %53 = arith.mulf %51, %52 : vector<16x128xf32>
    %c2_i32 = arith.constant 2 : i32
    %54 = vector.broadcast %c2_i32 : i32 to vector<16x128xi32>
    %55 = arith.cmpi sge, %23, %54 : vector<16x128xi32>
    %c2_i32_29 = arith.constant 2 : i32
    %56 = tpu.dynamic_rotate %53 by %c2_i32_29 dim 1 : vector<16x128xf32>, i32 -> vector<16x128xf32>
    %cst_30 = arith.constant 0.000000e+00 : f32
    %57 = vector.broadcast %cst_30 : f32 to vector<16x128xf32>
    %58 = arith.select %55, %56, %57 : vector<16x128xi1>, vector<16x128xf32>
    %c6_i32 = arith.constant 6 : i32
    %59 = vector.broadcast %c6_i32 : i32 to vector<16x128xi32>
    %60 = arith.cmpi slt, %23, %59 : vector<16x128xi32>
    %c126_i32 = arith.constant 126 : i32
    %61 = tpu.dynamic_rotate %53 by %c126_i32 dim 1 : vector<16x128xf32>, i32 -> vector<16x128xf32>
    %cst_31 = arith.constant 0.000000e+00 : f32
    %62 = vector.broadcast %cst_31 : f32 to vector<16x128xf32>
    %63 = arith.select %60, %61, %62 : vector<16x128xi1>, vector<16x128xf32>
    %64 = tpu.concatenate %58, %53, %63 in 0 : vector<16x128xf32>, vector<16x128xf32>, vector<16x128xf32> -> vector<48x128xf32>
    %c1 = arith.constant 1 : index
    %c0_32 = arith.constant 0 : index
    %c0_33 = arith.constant 0 : index
    %65 = vector.load %arg5[%c1, %c0_32, %c0_33] : memref<3x16x48xf32, #tpu.memory_space<vmem>>, vector<1x16x48xf32>
    %66 = vector.shape_cast %65 : vector<1x16x48xf32> to vector<16x48xf32>
    %cst_34 = arith.constant dense<0.000000e+00> : vector<16x128xf32>
    %67 = tpu.matmul %66, %64, %cst_34 {dimension_numbers = #tpu.dot_dimension_numbers<[1], [0], [0], [1], [0, 0, 1, 1], [], []>} : vector<16x48xf32>, vector<48x128xf32>, vector<16x128xf32> -> vector<16x128xf32>
    %c1_35 = arith.constant 1 : index
    %c0_36 = arith.constant 0 : index
    %c0_37 = arith.constant 0 : index
    %68 = vector.load %arg6[%c1_35, %c0_36, %c0_37] : memref<3x16x1xf32, #tpu.memory_space<vmem>>, vector<1x16x1xf32>
    %69 = vector.shape_cast %68 : vector<1x16x1xf32> to vector<16x1xf32>
    %70 = vector.broadcast %69 : vector<16x1xf32> to vector<16x128xf32>
    %71 = arith.addf %67, %70 : vector<16x128xf32>
    %cst_38 = arith.constant 0.000000e+00 : f32
    %72 = vector.broadcast %cst_38 : f32 to vector<16x128xf32>
    %73 = arith.maximumf %71, %72 : vector<16x128xf32>
    %c1_39 = arith.constant 1 : index
    %c0_40 = arith.constant 0 : index
    %c0_41 = arith.constant 0 : index
    %74 = vector.load %arg7[%c1_39, %c0_40, %c0_41] : memref<3x16x16xf32, #tpu.memory_space<vmem>>, vector<1x16x16xf32>
    %75 = vector.shape_cast %74 : vector<1x16x16xf32> to vector<16x16xf32>
    %cst_42 = arith.constant dense<0.000000e+00> : vector<16x128xf32>
    %76 = tpu.matmul %75, %73, %cst_42 {dimension_numbers = #tpu.dot_dimension_numbers<[1], [0], [0], [1], [0, 0, 1, 1], [], []>} : vector<16x16xf32>, vector<16x128xf32>, vector<16x128xf32> -> vector<16x128xf32>
    %c1_43 = arith.constant 1 : index
    %c0_44 = arith.constant 0 : index
    %c0_45 = arith.constant 0 : index
    %77 = vector.load %arg8[%c1_43, %c0_44, %c0_45] : memref<3x16x1xf32, #tpu.memory_space<vmem>>, vector<1x16x1xf32>
    %78 = vector.shape_cast %77 : vector<1x16x1xf32> to vector<16x1xf32>
    %79 = vector.broadcast %78 : vector<16x1xf32> to vector<16x128xf32>
    %80 = arith.addf %76, %79 : vector<16x128xf32>
    %81 = arith.addf %53, %80 : vector<16x128xf32>
    %82 = vector.broadcast %1 : vector<1x128xf32> to vector<16x128xf32>
    %83 = arith.mulf %81, %82 : vector<16x128xf32>
    %c4_i32 = arith.constant 4 : i32
    %84 = vector.broadcast %c4_i32 : i32 to vector<16x128xi32>
    %85 = arith.cmpi sge, %23, %84 : vector<16x128xi32>
    %c4_i32_46 = arith.constant 4 : i32
    %86 = tpu.dynamic_rotate %83 by %c4_i32_46 dim 1 : vector<16x128xf32>, i32 -> vector<16x128xf32>
    %cst_47 = arith.constant 0.000000e+00 : f32
    %87 = vector.broadcast %cst_47 : f32 to vector<16x128xf32>
    %88 = arith.select %85, %86, %87 : vector<16x128xi1>, vector<16x128xf32>
    %c4_i32_48 = arith.constant 4 : i32
    %89 = vector.broadcast %c4_i32_48 : i32 to vector<16x128xi32>
    %90 = arith.cmpi slt, %23, %89 : vector<16x128xi32>
    %c124_i32 = arith.constant 124 : i32
    %91 = tpu.dynamic_rotate %83 by %c124_i32 dim 1 : vector<16x128xf32>, i32 -> vector<16x128xf32>
    %cst_49 = arith.constant 0.000000e+00 : f32
    %92 = vector.broadcast %cst_49 : f32 to vector<16x128xf32>
    %93 = arith.select %90, %91, %92 : vector<16x128xi1>, vector<16x128xf32>
    %94 = tpu.concatenate %88, %83, %93 in 0 : vector<16x128xf32>, vector<16x128xf32>, vector<16x128xf32> -> vector<48x128xf32>
    %c2 = arith.constant 2 : index
    %c0_50 = arith.constant 0 : index
    %c0_51 = arith.constant 0 : index
    %95 = vector.load %arg5[%c2, %c0_50, %c0_51] : memref<3x16x48xf32, #tpu.memory_space<vmem>>, vector<1x16x48xf32>
    %96 = vector.shape_cast %95 : vector<1x16x48xf32> to vector<16x48xf32>
    %cst_52 = arith.constant dense<0.000000e+00> : vector<16x128xf32>
    %97 = tpu.matmul %96, %94, %cst_52 {dimension_numbers = #tpu.dot_dimension_numbers<[1], [0], [0], [1], [0, 0, 1, 1], [], []>} : vector<16x48xf32>, vector<48x128xf32>, vector<16x128xf32> -> vector<16x128xf32>
    %c2_53 = arith.constant 2 : index
    %c0_54 = arith.constant 0 : index
    %c0_55 = arith.constant 0 : index
    %98 = vector.load %arg6[%c2_53, %c0_54, %c0_55] : memref<3x16x1xf32, #tpu.memory_space<vmem>>, vector<1x16x1xf32>
    %99 = vector.shape_cast %98 : vector<1x16x1xf32> to vector<16x1xf32>
    %100 = vector.broadcast %99 : vector<16x1xf32> to vector<16x128xf32>
    %101 = arith.addf %97, %100 : vector<16x128xf32>
    %cst_56 = arith.constant 0.000000e+00 : f32
    %102 = vector.broadcast %cst_56 : f32 to vector<16x128xf32>
    %103 = arith.maximumf %101, %102 : vector<16x128xf32>
    %c2_57 = arith.constant 2 : index
    %c0_58 = arith.constant 0 : index
    %c0_59 = arith.constant 0 : index
    %104 = vector.load %arg7[%c2_57, %c0_58, %c0_59] : memref<3x16x16xf32, #tpu.memory_space<vmem>>, vector<1x16x16xf32>
    %105 = vector.shape_cast %104 : vector<1x16x16xf32> to vector<16x16xf32>
    %cst_60 = arith.constant dense<0.000000e+00> : vector<16x128xf32>
    %106 = tpu.matmul %105, %103, %cst_60 {dimension_numbers = #tpu.dot_dimension_numbers<[1], [0], [0], [1], [0, 0, 1, 1], [], []>} : vector<16x16xf32>, vector<16x128xf32>, vector<16x128xf32> -> vector<16x128xf32>
    %c2_61 = arith.constant 2 : index
    %c0_62 = arith.constant 0 : index
    %c0_63 = arith.constant 0 : index
    %107 = vector.load %arg8[%c2_61, %c0_62, %c0_63] : memref<3x16x1xf32, #tpu.memory_space<vmem>>, vector<1x16x1xf32>
    %108 = vector.shape_cast %107 : vector<1x16x1xf32> to vector<16x1xf32>
    %109 = vector.broadcast %108 : vector<16x1xf32> to vector<16x128xf32>
    %110 = arith.addf %106, %109 : vector<16x128xf32>
    %111 = arith.addf %83, %110 : vector<16x128xf32>
    %112 = vector.broadcast %1 : vector<1x128xf32> to vector<16x128xf32>
    %113 = arith.mulf %111, %112 : vector<16x128xf32>
    %c0_64 = arith.constant 0 : index
    %c0_65 = arith.constant 0 : index
    %114 = vector.load %arg9[%c0_64, %c0_65] : memref<8x16xf32, #tpu.memory_space<vmem>>, vector<8x16xf32>
    %cst_66 = arith.constant dense<0.000000e+00> : vector<8x128xf32>
    %115 = tpu.matmul %114, %113, %cst_66 {dimension_numbers = #tpu.dot_dimension_numbers<[1], [0], [0], [1], [0, 0, 1, 1], [], []>} : vector<8x16xf32>, vector<16x128xf32>, vector<8x128xf32> -> vector<8x128xf32>
    %c0_67 = arith.constant 0 : index
    %c0_68 = arith.constant 0 : index
    %116 = vector.load %arg10[%c0_67, %c0_68] : memref<8x1xf32, #tpu.memory_space<vmem>>, vector<8x1xf32>
    %117 = vector.broadcast %116 : vector<8x1xf32> to vector<8x128xf32>
    %118 = arith.addf %115, %117 : vector<8x128xf32>
    %119 = vector.broadcast %1 : vector<1x128xf32> to vector<8x128xf32>
    %120 = arith.mulf %118, %119 : vector<8x128xf32>
    %c0_69 = arith.constant 0 : index
    %c0_70 = arith.constant 0 : index
    %121 = vector.load %arg11[%c0_69, %c0_70] : memref<8x128xf32, #tpu.memory_space<vmem>>, vector<8x128xf32>
    tpu.vector_store %arg11[%c0_69, %c0_70], %120 {strides = array<i32>} : memref<8x128xf32, #tpu.memory_space<vmem>>, vector<8x128xf32>,
    return
  }
  func.func @transform_0(%arg0: i32) -> (i32, i32) {
    %c0_i32 = arith.constant 0 : i32
    %c0_i32_0 = arith.constant 0 : i32
    %c0_i32_1 = arith.constant 0 : i32
    return %c0_i32, %c0_i32_0 : i32, i32
  }
  func.func @transform_1(%arg0: i32) -> (i32, i32) {
    %c0_i32 = arith.constant 0 : i32
    %c0_i32_0 = arith.constant 0 : i32
    %c0_i32_1 = arith.constant 0 : i32
    return %c0_i32, %c0_i32_0 : i32, i32
  }
  func.func @transform_2(%arg0: i32) -> (i32, i32) {
    %c0_i32 = arith.constant 0 : i32
    %c0_i32_0 = arith.constant 0 : i32
    %c0_i32_1 = arith.constant 0 : i32
    return %c0_i32, %c0_i32_0 : i32, i32
  }
  func.func @transform_3(%arg0: i32) -> (i32, i32) {
    %c0_i32 = arith.constant 0 : i32
    %c0_i32_0 = arith.constant 0 : i32
    %c0_i32_1 = arith.constant 0 : i32
    return %c0_i32, %c0_i32_0 : i32, i32
  }
  func.func @transform_4(%arg0: i32) -> (i32, i32, i32) {
    %c0_i32 = arith.constant 0 : i32
    %c0_i32_0 = arith.constant 0 : i32
    %c0_i32_1 = arith.constant 0 : i32
    %c0_i32_2 = arith.constant 0 : i32
    return %c0_i32, %c0_i32_0, %c0_i32_1 : i32, i32, i32
  }
  func.func @transform_5(%arg0: i32) -> (i32, i32, i32) {
    %c0_i32 = arith.constant 0 : i32
    %c0_i32_0 = arith.constant 0 : i32
    %c0_i32_1 = arith.constant 0 : i32
    %c0_i32_2 = arith.constant 0 : i32
    return %c0_i32, %c0_i32_0, %c0_i32_1 : i32, i32, i32
  }
  func.func @transform_6(%arg0: i32) -> (i32, i32, i32) {
    %c0_i32 = arith.constant 0 : i32
    %c0_i32_0 = arith.constant 0 : i32
    %c0_i32_1 = arith.constant 0 : i32
    %c0_i32_2 = arith.constant 0 : i32
    return %c0_i32, %c0_i32_0, %c0_i32_1 : i32, i32, i32
  }
  func.func @transform_7(%arg0: i32) -> (i32, i32, i32) {
    %c0_i32 = arith.constant 0 : i32
    %c0_i32_0 = arith.constant 0 : i32
    %c0_i32_1 = arith.constant 0 : i32
    %c0_i32_2 = arith.constant 0 : i32
    return %c0_i32, %c0_i32_0, %c0_i32_1 : i32, i32, i32
  }
  func.func @transform_8(%arg0: i32) -> (i32, i32) {
    %c0_i32 = arith.constant 0 : i32
    %c0_i32_0 = arith.constant 0 : i32
    %c0_i32_1 = arith.constant 0 : i32
    return %c0_i32, %c0_i32_0 : i32, i32
  }
  func.func @transform_9(%arg0: i32) -> (i32, i32) {
    %c0_i32 = arith.constant 0 : i32
    %c0_i32_0 = arith.constant 0 : i32
    %c0_i32_1 = arith.constant 0 : i32
    return %c0_i32, %c0_i32_0 : i32, i32
  }
  func.func @transform_10(%arg0: i32) -> (i32, i32) {
    %c0_i32 = arith.constant 0 : i32
    %c0_i32_0 = arith.constant 0 : i32
    %c0_i32_1 = arith.constant 0 : i32
    return %c0_i32, %c0_i32_0 : i32, i32
  }
}

</mosaic_0001>

<llo_original>
// kernel: tpu_custom_call.1
$region0: #{tpu_custom_call.1}
  #allocation0 [shape = 'u32[]', space=smem, size = 0x4, offset = 0x4, fixed_abs, tag = 'smem constant byte address 0x4 - core index']
  #allocation1 [shape = 'u32[144,128]{1,0:T(1,128)}', space=vmem, size = 0x12000, scoped, tag = 'internal scratch']
  %s0 = inlined_call_operand.vmem [shape: f32[32,128], index: 0, kind: input, shape index: {}]
  %s1 = inlined_call_operand.hbm [shape: f32[1,128], index: 1, kind: input, shape index: {}]
  %s2 = inlined_call_operand.hbm [shape: f32[16,32], index: 2, kind: input, shape index: {}]
  %s3 = inlined_call_operand.vmem [shape: f32[16,1], index: 3, kind: input, shape index: {}]
  %s4 = inlined_call_operand.vmem [shape: f32[3,16,48], index: 4, kind: input, shape index: {}]
  %s5 = inlined_call_operand.vmem [shape: f32[3,16,1], index: 5, kind: input, shape index: {}]
  %s6 = inlined_call_operand.vmem [shape: f32[3,16,16], index: 6, kind: input, shape index: {}]
  %s7 = inlined_call_operand.vmem [shape: f32[3,16,1], index: 7, kind: input, shape index: {}]
  %s8 = inlined_call_operand.vmem [shape: f32[8,16], index: 8, kind: input, shape index: {}]
  %s9 = inlined_call_operand.vmem [shape: f32[8,1], index: 9, kind: input, shape index: {}]
  %s10 = inlined_call_operand.hbm [shape: f32[8,128], index: 10, kind: output, shape index: {}]
  %s11 = sld [smem:[#allocation0]]
  $region58: #{tpu_custom_call.1} parent=0
    _
  %s13 = ssub.s32 1, %s11
  %s14 = scalar_select 0, %s13, %s11
  $region1: #{tpu_custom_call.1} parent=0
    #allocation2 [shape = 'u8[512]{0}', space=vmem, size = 0x400, scoped, tag = 'input window, operand 1, single buffered']
    #allocation3 [shape = 's32[1]{0}', space=sflag, size = 0x4, scoped, tag = 'scoped memory for tpu_custom_call.1']
    #allocation4 [shape = 's32[1]{0}', space=sflag, size = 0x4, scoped, tag = 'scoped memory for tpu_custom_call.1']
    #allocation5 [shape = 'u8[8192]{0}', space=vmem, size = 0x2000, scoped, tag = 'input window, operand 2, single buffered']
    #allocation6 [shape = 's32[1]{0}', space=sflag, size = 0x4, scoped, tag = 'scoped memory for tpu_custom_call.1']
    #allocation7 [shape = 'u8[4096]{0}', space=vmem, size = 0x1000, scoped, tag = 'output window, operand 0, single buffered']
    %15 = vsyncpa [#allocation3], 0
    %16 = vsyncpa [#allocation6], 0
    %17 = vsyncpa [#allocation4], 0
    // Predicated region
    $region2: #{tpu_custom_call.1} parent=1 // pred_check
      _
    $region3: #{tpu_custom_call.1} parent=1 // pred_check_branch
      %19 = sbr.rel (0) target = $region5
    $region4: #{tpu_custom_call.1} parent=1 // pred_region
      _
    $region5: #{tpu_custom_call.1} parent=1 // pred_fallthru
      _
    // Predicated region
    $region6: #{tpu_custom_call.1} parent=1 // pred_check
      _
    $region7: #{tpu_custom_call.1} parent=1 // pred_check_branch
      %21 = sbr.rel (0) target = $region9
    $region8: #{tpu_custom_call.1} parent=1 // pred_region
      %s23 = ssub.s32 16, 16
      %24 = vsyncadd [#allocation3], %s23
      %s26 = sshll.u32 [#allocation2], 4
      %s27 = int_to_ptr.vmem [resolvable:$true] %s26
      %29 = dma.hbm_to_vmem [thread:$0]  %s1, 16, %s27, [#allocation3]
    $region9: #{tpu_custom_call.1} parent=1 // pred_fallthru
      _
    // Predicated region
    $region10: #{tpu_custom_call.1} parent=1 // pred_check
      _
    $region11: #{tpu_custom_call.1} parent=1 // pred_check_branch
      %31 = sbr.rel (0) target = $region13
    $region12: #{tpu_custom_call.1} parent=1 // pred_region
      %s33 = ssub.s32 256, 256
      %34 = vsyncadd [#allocation6], %s33
      %s35 = sshll.u32 [#allocation5], 4
      %s36 = int_to_ptr.vmem [resolvable:$true] %s35
      %41 = dma.hbm_to_vmem [thread:$0]  %s2, 256, %s36, [#allocation6], 128, 128, 8
    $region13: #{tpu_custom_call.1} parent=1 // pred_fallthru
      _
    // Predicated region
    $region14: #{tpu_custom_call.1} parent=1 // pred_check
      _
    $region15: #{tpu_custom_call.1} parent=1 // pred_check_branch
      %43 = sbr.rel (0) target = $region17
    $region16: #{tpu_custom_call.1} parent=1 // pred_region
      _
    $region17: #{tpu_custom_call.1} parent=1 // pred_fallthru
      _
    // Predicated region
    $region18: #{tpu_custom_call.1} parent=1 // pred_check
      _
    $region19: #{tpu_custom_call.1} parent=1 // pred_check_branch
      %45 = sbr.rel (0) target = $region21
    $region20: #{tpu_custom_call.1} parent=1 // pred_region
      _
    $region21: #{tpu_custom_call.1} parent=1 // pred_fallthru
      _
    // Predicated region
    $region22: #{tpu_custom_call.1} parent=1 // pred_check
      _
    $region23: #{tpu_custom_call.1} parent=1 // pred_check_branch
      %47 = sbr.rel (0) target = $region25
    $region24: #{tpu_custom_call.1} parent=1 // pred_region
      _
    $region25: #{tpu_custom_call.1} parent=1 // pred_fallthru
      _
    // Predicated region
    $region26: #{tpu_custom_call.1} parent=1 // pred_check
      _
    $region27: #{tpu_custom_call.1} parent=1 // pred_check_branch
      %49 = sbr.rel (0) target = $region29
    $region28: #{tpu_custom_call.1} parent=1 // pred_region
      _
    $region29: #{tpu_custom_call.1} parent=1 // pred_fallthru
      _
    // Predicated region
    $region30: #{tpu_custom_call.1} parent=1 // pred_check
      _
    $region31: #{tpu_custom_call.1} parent=1 // pred_check_branch
      %51 = sbr.rel (0) target = $region33
    $region32: #{tpu_custom_call.1} parent=1 // pred_region
      _
    $region33: #{tpu_custom_call.1} parent=1 // pred_fallthru
      _
    // Predicated region
    $region34: #{tpu_custom_call.1} parent=1 // pred_check
      _
    $region35: #{tpu_custom_call.1} parent=1 // pred_check_branch
      %53 = sbr.rel (0) target = $region37
    $region36: #{tpu_custom_call.1} parent=1 // pred_region
      _
    $region37: #{tpu_custom_call.1} parent=1 // pred_fallthru
      _
    // Predicated region
    $region38: #{tpu_custom_call.1} parent=1 // pred_check
      _
    $region39: #{tpu_custom_call.1} parent=1 // pred_check_branch
      %55 = sbr.rel (0) target = $region41
    $region40: #{tpu_custom_call.1} parent=1 // pred_region
      _
    $region41: #{tpu_custom_call.1} parent=1 // pred_fallthru
      _
    // Predicated region
    $region42: #{tpu_custom_call.1} parent=1 // pred_check
      _
    $region43: #{tpu_custom_call.1} parent=1 // pred_check_branch
      %57 = sbr.rel (0) target = $region45
    $region44: #{tpu_custom_call.1} parent=1 // pred_region
      %58 = dma.done [#allocation3], 16
    $region45: #{tpu_custom_call.1} parent=1 // pred_fallthru
      _
    // Predicated region
    $region46: #{tpu_custom_call.1} parent=1 // pred_check
      _
    $region47: #{tpu_custom_call.1} parent=1 // pred_check_branch
      %60 = sbr.rel (0) target = $region49
    $region48: #{tpu_custom_call.1} parent=1 // pred_region
      %61 = dma.done [#allocation6], 256
    $region49: #{tpu_custom_call.1} parent=1 // pred_fallthru
      _
    %v62 = vld [vmem:[%s0] sm:$0xff]
    %v63 = vld [vmem:[%s0 + $0x8] sm:$0xff]
    %v64 = vld [vmem:[%s0 + $0x10] sm:$0xff]
    %v65 = vld [vmem:[%s0 + $0x18] sm:$0xff]
    %v66 = vld [vmem:[#allocation2] sm:$0x1]
    %v67 = vld [vmem:[#allocation5] sm:$0xff]
    %v68 = vld [vmem:[#allocation5 + $0x8] sm:$0xff]
    %v69 = vld [vmem:[%s3] sm:$0xff]
    %v70 = vld [vmem:[%s3 + $0x8] sm:$0xff]
    %72 = vset.pattern.permute.xlu0 0
    %73 = vperm.xlu0 %72, %v69
    %v74 = vpop.permute.xlu0 %73
    %77 = vset.pattern.permute.xlu0 0
    %78 = vperm.xlu0 %77, %v70
    %v79 = vpop.permute.xlu0 %78
    %vm81 = vcmask 261120
    %v83 = vsel %vm81, %v67, 0
    %v86 = vsel %vm81, %v68, 0
    %88 = vmatprep.subr.mxu0 0.0
    %89 = vmatpush1.msra.mxu0 %v62
    %90 = vmatprep.subr.mxu0 0.0
    %91 = vmatpush1.msra.mxu0 %v63
    %92 = vmatprep.subr.mxu0 0.0
    %93 = vmatpush1.msra.mxu0 %v64
    %94 = vmatprep.subr.mxu0 0.0
    %95 = vmatpush1.msra.mxu0 %v65
    %96 = vmatprep.subr.mxu0 0.0
    %97 = vmatpush1.msra.mxu0 0.0
    %98 = vmatprep.subr.mxu0 0.0
    %99 = vmatpush1.msra.mxu0 0.0
    %100 = vmatprep.subr.mxu0 0.0
    %101 = vmatpush1.msra.mxu0 0.0
    %102 = vmatprep.subr.mxu0 0.0
    %103 = vmatpush1.msra.mxu0 0.0
    %104 = vmatprep.subr.mxu0 0.0
    %105 = vmatpush1.msra.mxu0 0.0
    %106 = vmatprep.subr.mxu0 0.0
    %107 = vmatpush1.msra.mxu0 0.0
    %108 = vmatprep.subr.mxu0 0.0
    %109 = vmatpush1.msra.mxu0 0.0
    %110 = vmatprep.subr.mxu0 0.0
    %111 = vmatpush1.msra.mxu0 0.0
    %112 = vmatprep.subr.mxu0 0.0
    %113 = vmatpush1.msra.mxu0 0.0
    %114 = vmatprep.subr.mxu0 0.0
    %115 = vmatpush1.msra.mxu0 0.0
    %116 = vmatprep.subr.mxu0 0.0
    %117 = vmatpush1.msra.mxu0 0.0
    %118 = vmatprep.subr.mxu0 0.0
    %119 = vmatpush1.msra.mxu0 0.0
    %120 = vmatprep.subr.mxu0 0.0
    %121 = vmatpush1.msra.mxu0 0.0
    %122 = vmatprep.subr.mxu0 0.0
    %123 = vmatpush1.msra.mxu0 0.0
    %124 = vmatprep.subr.mxu0 0.0
    %125 = vmatpush1.msra.mxu0 0.0
    %126 = vmatprep.subr.mxu0 0.0
    %127 = vmatpush1.msra.mxu0 0.0
    %128 = vmatprep.subr.mxu0 0.0
    %129 = vmatpush1.msra.mxu0 0.0
    %130 = vmatprep.subr.mxu0 0.0
    %131 = vmatpush1.msra.mxu0 0.0
    %132 = vmatprep.subr.mxu0 0.0
    %133 = vmatpush1.msra.mxu0 0.0
    %134 = vmatprep.subr.mxu0 0.0
    %135 = vmatpush1.msra.mxu0 0.0
    %136 = vmatprep.subr.mxu0 0.0
    %137 = vmatpush1.msra.mxu0 0.0
    %138 = vmatprep.subr.mxu0 0.0
    %139 = vmatpush1.msra.mxu0 0.0
    %140 = vmatprep.subr.mxu0 0.0
    %141 = vmatpush1.msra.mxu0 0.0
    %142 = vmatprep.subr.mxu0 0.0
    %143 = vmatpush1.msra.mxu0 0.0
    %144 = vmatprep.subr.mxu0 0.0
    %145 = vmatpush1.msra.mxu0 0.0
    %146 = vmatprep.subr.mxu0 0.0
    %147 = vmatpush1.msra.mxu0 0.0
    %148 = vmatprep.subr.mxu0 0.0
    %149 = vmatpush1.msra.mxu0 0.0
    %150 = vmatprep.subr.mxu0 0.0
    %151 = vmatpush1.msra.mxu0 0.0
    %152 = vmatprep.mubr.f32.mxu0 0.0
    %153 = vmatmul.mubr.f32.gmra.mrb[0].mxu0 %v83
    %v154 = vpop.f32.mrb[0].mxu0
    %v155 = vadd.f32 %v74, %v154
    %v156 = vpop.f32.mrb[0].mxu0
    %157 = vmatprep.mubr.f32.mxu0 0.0
    %158 = vmatmul.mubr.f32.gmra.mrb[0].mxu0 %v86
    %v159 = vpop.f32.mrb[0].mxu0
    %v160 = vadd.f32 %v79, %v159
    %v161 = vpop.f32.mrb[0].mxu0
    %162 = vdwg.mxu0
    %v163 = vlaneseq
    %v164 = vand.u32 %v163, 127
    %vm165 = vcmp.lt.s32.totalorder %v164, 0
    %v166 = vsub.s32 0, %v164
    %v167 = vsel %vm165, %v166, %v164
    %v168 = vshrl.u32 %v167, 3
    %v169 = vand.u32 %v167, 7
    %v170 = vsub.s32 0, %v169
    %v171 = vsel %vm165, %v170, %v169
    %vm172 = vcmp.ne.s32.totalorder %v171, 0
    %vm173 = vcmp.lt.s32.totalorder %v171, 0
    %vm174 = vmand %vm173, %vm172
    %v175 = vadd.s32 %v171, 8
    %v176 = vsel %vm174, %v175, %v171
    %vm177 = vcmp.ge.s32.totalorder %v176, 1
    %178 = vrot.lane.b32.xlu0 %v155, 1
    %v179 = vpop.permute.xlu0 %178
    %180 = vrot.lane.b32.xlu0 %v160, 1
    %v181 = vpop.permute.xlu0 %180
    %v182 = vsel %vm177, %v179, 0.0
    %v183 = vsel %vm177, %v181, 0.0
    %vm184 = vcmp.lt.s32.totalorder %v176, 7
    %185 = vrot.lane.b32.xlu0 %v155, 127
    %v186 = vpop.permute.xlu0 %185
    %187 = vrot.lane.b32.xlu0 %v160, 127
    %v188 = vpop.permute.xlu0 %187
    %v189 = vsel %vm184, %v186, 0.0
    %v190 = vsel %vm184, %v188, 0.0
    %v191 = vld [vmem:[%s4] sm:$0xff]
    %v192 = vld [vmem:[%s4 + $0x8] sm:$0xff]
    %v193 = vld [vmem:[%s5] sm:$0xff]
    %v194 = vld [vmem:[%s5 + $0x8] sm:$0xff]
    %196 = vset.pattern.permute.xlu0 0
    %197 = vperm.xlu0 %196, %v193
    %v198 = vpop.permute.xlu0 %197
    %201 = vset.pattern.permute.xlu0 0
    %202 = vperm.xlu0 %201, %v194
    %v203 = vpop.permute.xlu0 %202
    %vm205 = vcmask 392192
    %v207 = vsel %vm205, %v191, 0
    %v210 = vsel %vm205, %v192, 0
    %212 = vmatprep.subr.mxu0 0.0
    %213 = vmatpush1.msra.mxu0 %v182
    %214 = vmatprep.subr.mxu0 0.0
    %215 = vmatpush1.msra.mxu0 %v183
    %216 = vmatprep.subr.mxu0 0.0
    %217 = vmatpush1.msra.mxu0 %v155
    %218 = vmatprep.subr.mxu0 0.0
    %219 = vmatpush1.msra.mxu0 %v160
    %220 = vmatprep.subr.mxu0 0.0
    %221 = vmatpush1.msra.mxu0 %v189
    %222 = vmatprep.subr.mxu0 0.0
    %223 = vmatpush1.msra.mxu0 %v190
    %224 = vmatprep.subr.mxu0 0.0
    %225 = vmatpush1.msra.mxu0 0.0
    %226 = vmatprep.subr.mxu0 0.0
    %227 = vmatpush1.msra.mxu0 0.0
    %228 = vmatprep.subr.mxu0 0.0
    %229 = vmatpush1.msra.mxu0 0.0
    %230 = vmatprep.subr.mxu0 0.0
    %231 = vmatpush1.msra.mxu0 0.0
    %232 = vmatprep.subr.mxu0 0.0
    %233 = vmatpush1.msra.mxu0 0.0
    %234 = vmatprep.subr.mxu0 0.0
    %235 = vmatpush1.msra.mxu0 0.0
    %236 = vmatprep.subr.mxu0 0.0
    %237 = vmatpush1.msra.mxu0 0.0
    %238 = vmatprep.subr.mxu0 0.0
    %239 = vmatpush1.msra.mxu0 0.0
    %240 = vmatprep.subr.mxu0 0.0
    %241 = vmatpush1.msra.mxu0 0.0
    %242 = vmatprep.subr.mxu0 0.0
    %243 = vmatpush1.msra.mxu0 0.0
    %244 = vmatprep.subr.mxu0 0.0
    %245 = vmatpush1.msra.mxu0 0.0
    %246 = vmatprep.subr.mxu0 0.0
    %247 = vmatpush1.msra.mxu0 0.0
    %248 = vmatprep.subr.mxu0 0.0
    %249 = vmatpush1.msra.mxu0 0.0
    %250 = vmatprep.subr.mxu0 0.0
    %251 = vmatpush1.msra.mxu0 0.0
    %252 = vmatprep.subr.mxu0 0.0
    %253 = vmatpush1.msra.mxu0 0.0
    %254 = vmatprep.subr.mxu0 0.0
    %255 = vmatpush1.msra.mxu0 0.0
    %256 = vmatprep.subr.mxu0 0.0
    %257 = vmatpush1.msra.mxu0 0.0
    %258 = vmatprep.subr.mxu0 0.0
    %259 = vmatpush1.msra.mxu0 0.0
    %260 = vmatprep.subr.mxu0 0.0
    %261 = vmatpush1.msra.mxu0 0.0
    %262 = vmatprep.subr.mxu0 0.0
    %263 = vmatpush1.msra.mxu0 0.0
    %264 = vmatprep.subr.mxu0 0.0
    %265 = vmatpush1.msra.mxu0 0.0
    %266 = vmatprep.subr.mxu0 0.0
    %267 = vmatpush1.msra.mxu0 0.0
    %268 = vmatprep.subr.mxu0 0.0
    %269 = vmatpush1.msra.mxu0 0.0
    %270 = vmatprep.subr.mxu0 0.0
    %271 = vmatpush1.msra.mxu0 0.0
    %272 = vmatprep.subr.mxu0 0.0
    %273 = vmatpush1.msra.mxu0 0.0
    %274 = vmatprep.subr.mxu0 0.0
    %275 = vmatpush1.msra.mxu0 0.0
    %276 = vmatprep.mubr.f32.mxu0 0.0
    %277 = vmatmul.mubr.f32.gmra.mrb[0].mxu0 %v207
    %v278 = vpop.f32.mrb[0].mxu0
    %v279 = vadd.f32 %v198, %v278
    %v280 = vpop.f32.mrb[0].mxu0
    %281 = vmatprep.mubr.f32.mxu0 0.0
    %282 = vmatmul.mubr.f32.gmra.mrb[0].mxu0 %v210
    %v283 = vpop.f32.mrb[0].mxu0
    %v284 = vadd.f32 %v203, %v283
    %v285 = vpop.f32.mrb[0].mxu0
    %286 = vdwg.mxu0
    %v287 = vmax.f32 %v279, 0.0
    %v288 = vmax.f32 %v284, 0.0
    %v289 = vld [vmem:[%s6] sm:$0xff]
    %v290 = vld [vmem:[%s6 + $0x8] sm:$0xff]
    %v291 = vld [vmem:[%s7] sm:$0xff]
    %v292 = vld [vmem:[%s7 + $0x8] sm:$0xff]
    %294 = vset.pattern.permute.xlu0 0
    %295 = vperm.xlu0 %294, %v291
    %v296 = vpop.permute.xlu0 %295
    %299 = vset.pattern.permute.xlu0 0
    %300 = vperm.xlu0 %299, %v292
    %v301 = vpop.permute.xlu0 %300
    %vm303 = vcmask 130048
    %v305 = vsel %vm303, %v289, 0
    %v308 = vsel %vm303, %v290, 0
    %310 = vmatprep.subr.mxu0 0.0
    %311 = vmatpush1.msra.mxu0 %v287
    %312 = vmatprep.subr.mxu0 0.0
    %313 = vmatpush1.msra.mxu0 %v288
    %314 = vmatprep.subr.mxu0 0.0
    %315 = vmatpush1.msra.mxu0 0.0
    %316 = vmatprep.subr.mxu0 0.0
    %317 = vmatpush1.msra.mxu0 0.0
    %318 = vmatprep.subr.mxu0 0.0
    %319 = vmatpush1.msra.mxu0 0.0
    %320 = vmatprep.subr.mxu0 0.0
    %321 = vmatpush1.msra.mxu0 0.0
    %322 = vmatprep.subr.mxu0 0.0
    %323 = vmatpush1.msra.mxu0 0.0
    %324 = vmatprep.subr.mxu0 0.0
    %325 = vmatpush1.msra.mxu0 0.0
    %326 = vmatprep.subr.mxu0 0.0
    %327 = vmatpush1.msra.mxu0 0.0
    %328 = vmatprep.subr.mxu0 0.0
    %329 = vmatpush1.msra.mxu0 0.0
    %330 = vmatprep.subr.mxu0 0.0
    %331 = vmatpush1.msra.mxu0 0.0
    %332 = vmatprep.subr.mxu0 0.0
    %333 = vmatpush1.msra.mxu0 0.0
    %334 = vmatprep.subr.mxu0 0.0
    %335 = vmatpush1.msra.mxu0 0.0
    %336 = vmatprep.subr.mxu0 0.0
    %337 = vmatpush1.msra.mxu0 0.0
    %338 = vmatprep.subr.mxu0 0.0
    %339 = vmatpush1.msra.mxu0 0.0
    %340 = vmatprep.subr.mxu0 0.0
    %341 = vmatpush1.msra.mxu0 0.0
    %342 = vmatprep.subr.mxu0 0.0
    %343 = vmatpush1.msra.mxu0 0.0
    %344 = vmatprep.subr.mxu0 0.0
    %345 = vmatpush1.msra.mxu0 0.0
    %346 = vmatprep.subr.mxu0 0.0
    %347 = vmatpush1.msra.mxu0 0.0
    %348 = vmatprep.subr.mxu0 0.0
    %349 = vmatpush1.msra.mxu0 0.0
    %350 = vmatprep.subr.mxu0 0.0
    %351 = vmatpush1.msra.mxu0 0.0
    %352 = vmatprep.subr.mxu0 0.0
    %353 = vmatpush1.msra.mxu0 0.0
    %354 = vmatprep.subr.mxu0 0.0
    %355 = vmatpush1.msra.mxu0 0.0
    %356 = vmatprep.subr.mxu0 0.0
    %357 = vmatpush1.msra.mxu0 0.0
    %358 = vmatprep.subr.mxu0 0.0
    %359 = vmatpush1.msra.mxu0 0.0
    %360 = vmatprep.subr.mxu0 0.0
    %361 = vmatpush1.msra.mxu0 0.0
    %362 = vmatprep.subr.mxu0 0.0
    %363 = vmatpush1.msra.mxu0 0.0
    %364 = vmatprep.subr.mxu0 0.0
    %365 = vmatpush1.msra.mxu0 0.0
    %366 = vmatprep.subr.mxu0 0.0
    %367 = vmatpush1.msra.mxu0 0.0
    %368 = vmatprep.subr.mxu0 0.0
    %369 = vmatpush1.msra.mxu0 0.0
    %370 = vmatprep.subr.mxu0 0.0
    %371 = vmatpush1.msra.mxu0 0.0
    %372 = vmatprep.subr.mxu0 0.0
    %373 = vmatpush1.msra.mxu0 0.0
    %374 = vmatprep.mubr.f32.mxu0 0.0
    %375 = vmatmul.mubr.f32.gmra.mrb[0].mxu0 %v305
    %v376 = vpop.f32.mrb[0].mxu0
    %v377 = vadd.f32 %v296, %v376
    %v378 = vpop.f32.mrb[0].mxu0
    %379 = vmatprep.mubr.f32.mxu0 0.0
    %380 = vmatmul.mubr.f32.gmra.mrb[0].mxu0 %v308
    %v381 = vpop.f32.mrb[0].mxu0
    %v382 = vadd.f32 %v301, %v381
    %v383 = vpop.f32.mrb[0].mxu0
    %384 = vdwg.mxu0
    %v385 = vadd.f32 %v155, %v377
    %v386 = vadd.f32 %v160, %v382
    %v388 = vlaneseq
    %v389 = vshrl.u32 %v388, 7
    %v390 = vsub.s32 0, %v389
    %v391 = vrot.slane %v66, %v390
    %v393 = vmul.f32 %v385, %v391
    %v394 = vmul.f32 %v386, %v391
    %vm395 = vcmp.ge.s32.totalorder %v176, 2
    %396 = vrot.lane.b32.xlu0 %v393, 2
    %v397 = vpop.permute.xlu0 %396
    %398 = vrot.lane.b32.xlu0 %v394, 2
    %v399 = vpop.permute.xlu0 %398
    %v400 = vsel %vm395, %v397, 0.0
    %v401 = vsel %vm395, %v399, 0.0
    %vm402 = vcmp.lt.s32.totalorder %v176, 6
    %403 = vrot.lane.b32.xlu0 %v393, 126
    %v404 = vpop.permute.xlu0 %403
    %405 = vrot.lane.b32.xlu0 %v394, 126
    %v406 = vpop.permute.xlu0 %405
    %v407 = vsel %vm402, %v404, 0.0
    %v408 = vsel %vm402, %v406, 0.0
    %s409 = scalar_lea.vmem %s4, 16
    %v410 = vld [vmem:[%s409] sm:$0xff]
    %v411 = vld [vmem:[%s409 + $0x8] sm:$0xff]
    %s412 = scalar_lea.vmem %s5, 16
    %v413 = vld [vmem:[%s412] sm:$0xff]
    %v414 = vld [vmem:[%s412 + $0x8] sm:$0xff]
    %416 = vset.pattern.permute.xlu0 0
    %417 = vperm.xlu0 %416, %v413
    %v418 = vpop.permute.xlu0 %417
    %421 = vset.pattern.permute.xlu0 0
    %422 = vperm.xlu0 %421, %v414
    %v423 = vpop.permute.xlu0 %422
    %v426 = vsel %vm205, %v410, 0
    %v429 = vsel %vm205, %v411, 0
    %431 = vmatprep.subr.mxu0 0.0
    %432 = vmatpush1.msra.mxu0 %v400
    %433 = vmatprep.subr.mxu0 0.0
    %434 = vmatpush1.msra.mxu0 %v401
    %435 = vmatprep.subr.mxu0 0.0
    %436 = vmatpush1.msra.mxu0 %v393
    %437 = vmatprep.subr.mxu0 0.0
    %438 = vmatpush1.msra.mxu0 %v394
    %439 = vmatprep.subr.mxu0 0.0
    %440 = vmatpush1.msra.mxu0 %v407
    %441 = vmatprep.subr.mxu0 0.0
    %442 = vmatpush1.msra.mxu0 %v408
    %443 = vmatprep.subr.mxu0 0.0
    %444 = vmatpush1.msra.mxu0 0.0
    %445 = vmatprep.subr.mxu0 0.0
    %446 = vmatpush1.msra.mxu0 0.0
    %447 = vmatprep.subr.mxu0 0.0
    %448 = vmatpush1.msra.mxu0 0.0
    %449 = vmatprep.subr.mxu0 0.0
    %450 = vmatpush1.msra.mxu0 0.0
    %451 = vmatprep.subr.mxu0 0.0
    %452 = vmatpush1.msra.mxu0 0.0
    %453 = vmatprep.subr.mxu0 0.0
    %454 = vmatpush1.msra.mxu0 0.0
    %455 = vmatprep.subr.mxu0 0.0
    %456 = vmatpush1.msra.mxu0 0.0
    %457 = vmatprep.subr.mxu0 0.0
    %458 = vmatpush1.msra.mxu0 0.0
    %459 = vmatprep.subr.mxu0 0.0
    %460 = vmatpush1.msra.mxu0 0.0
    %461 = vmatprep.subr.mxu0 0.0
    %462 = vmatpush1.msra.mxu0 0.0
    %463 = vmatprep.subr.mxu0 0.0
    %464 = vmatpush1.msra.mxu0 0.0
    %465 = vmatprep.subr.mxu0 0.0
    %466 = vmatpush1.msra.mxu0 0.0
    %467 = vmatprep.subr.mxu0 0.0
    %468 = vmatpush1.msra.mxu0 0.0
    %469 = vmatprep.subr.mxu0 0.0
    %470 = vmatpush1.msra.mxu0 0.0
    %471 = vmatprep.subr.mxu0 0.0
    %472 = vmatpush1.msra.mxu0 0.0
    %473 = vmatprep.subr.mxu0 0.0
    %474 = vmatpush1.msra.mxu0 0.0
    %475 = vmatprep.subr.mxu0 0.0
    %476 = vmatpush1.msra.mxu0 0.0
    %477 = vmatprep.subr.mxu0 0.0
    %478 = vmatpush1.msra.mxu0 0.0
    %479 = vmatprep.subr.mxu0 0.0
    %480 = vmatpush1.msra.mxu0 0.0
    %481 = vmatprep.subr.mxu0 0.0
    %482 = vmatpush1.msra.mxu0 0.0
    %483 = vmatprep.subr.mxu0 0.0
    %484 = vmatpush1.msra.mxu0 0.0
    %485 = vmatprep.subr.mxu0 0.0
    %486 = vmatpush1.msra.mxu0 0.0
    %487 = vmatprep.subr.mxu0 0.0
    %488 = vmatpush1.msra.mxu0 0.0
    %489 = vmatprep.subr.mxu0 0.0
    %490 = vmatpush1.msra.mxu0 0.0
    %491 = vmatprep.subr.mxu0 0.0
    %492 = vmatpush1.msra.mxu0 0.0
    %493 = vmatprep.subr.mxu0 0.0
    %494 = vmatpush1.msra.mxu0 0.0
    %495 = vmatprep.mubr.f32.mxu0 0.0
    %496 = vmatmul.mubr.f32.gmra.mrb[0].mxu0 %v426
    %v497 = vpop.f32.mrb[0].mxu0
    %v498 = vadd.f32 %v418, %v497
    %v499 = vpop.f32.mrb[0].mxu0
    %500 = vmatprep.mubr.f32.mxu0 0.0
    %501 = vmatmul.mubr.f32.gmra.mrb[0].mxu0 %v429
    %v502 = vpop.f32.mrb[0].mxu0
    %v503 = vadd.f32 %v423, %v502
    %v504 = vpop.f32.mrb[0].mxu0
    %505 = vdwg.mxu0
    %v506 = vmax.f32 %v498, 0.0
    %v507 = vmax.f32 %v503, 0.0
    %s508 = scalar_lea.vmem %s6, 16
    %v509 = vld [vmem:[%s508] sm:$0xff]
    %v510 = vld [vmem:[%s508 + $0x8] sm:$0xff]
    %s511 = scalar_lea.vmem %s7, 16
    %v512 = vld [vmem:[%s511] sm:$0xff]
    %v513 = vld [vmem:[%s511 + $0x8] sm:$0xff]
    %515 = vset.pattern.permute.xlu0 0
    %516 = vperm.xlu0 %515, %v512
    %v517 = vpop.permute.xlu0 %516
    %520 = vset.pattern.permute.xlu0 0
    %521 = vperm.xlu0 %520, %v513
    %v522 = vpop.permute.xlu0 %521
    %v525 = vsel %vm303, %v509, 0
    %v528 = vsel %vm303, %v510, 0
    %530 = vmatprep.subr.mxu0 0.0
    %531 = vmatpush1.msra.mxu0 %v506
    %532 = vmatprep.subr.mxu0 0.0
    %533 = vmatpush1.msra.mxu0 %v507
    %534 = vmatprep.subr.mxu0 0.0
    %535 = vmatpush1.msra.mxu0 0.0
    %536 = vmatprep.subr.mxu0 0.0
    %537 = vmatpush1.msra.mxu0 0.0
    %538 = vmatprep.subr.mxu0 0.0
    %539 = vmatpush1.msra.mxu0 0.0
    %540 = vmatprep.subr.mxu0 0.0
    %541 = vmatpush1.msra.mxu0 0.0
    %542 = vmatprep.subr.mxu0 0.0
    %543 = vmatpush1.msra.mxu0 0.0
    %544 = vmatprep.subr.mxu0 0.0
    %545 = vmatpush1.msra.mxu0 0.0
    %546 = vmatprep.subr.mxu0 0.0
    %547 = vmatpush1.msra.mxu0 0.0
    %548 = vmatprep.subr.mxu0 0.0
    %549 = vmatpush1.msra.mxu0 0.0
    %550 = vmatprep.subr.mxu0 0.0
    %551 = vmatpush1.msra.mxu0 0.0
    %552 = vmatprep.subr.mxu0 0.0
    %553 = vmatpush1.msra.mxu0 0.0
    %554 = vmatprep.subr.mxu0 0.0
    %555 = vmatpush1.msra.mxu0 0.0
    %556 = vmatprep.subr.mxu0 0.0
    %557 = vmatpush1.msra.mxu0 0.0
    %558 = vmatprep.subr.mxu0 0.0
    %559 = vmatpush1.msra.mxu0 0.0
    %560 = vmatprep.subr.mxu0 0.0
    %561 = vmatpush1.msra.mxu0 0.0
    %562 = vmatprep.subr.mxu0 0.0
    %563 = vmatpush1.msra.mxu0 0.0
    %564 = vmatprep.subr.mxu0 0.0
    %565 = vmatpush1.msra.mxu0 0.0
    %566 = vmatprep.subr.mxu0 0.0
    %567 = vmatpush1.msra.mxu0 0.0
    %568 = vmatprep.subr.mxu0 0.0
    %569 = vmatpush1.msra.mxu0 0.0
    %570 = vmatprep.subr.mxu0 0.0
    %571 = vmatpush1.msra.mxu0 0.0
    %572 = vmatprep.subr.mxu0 0.0
    %573 = vmatpush1.msra.mxu0 0.0
    %574 = vmatprep.subr.mxu0 0.0
    %575 = vmatpush1.msra.mxu0 0.0
    %576 = vmatprep.subr.mxu0 0.0
    %577 = vmatpush1.msra.mxu0 0.0
    %578 = vmatprep.subr.mxu0 0.0
    %579 = vmatpush1.msra.mxu0 0.0
    %580 = vmatprep.subr.mxu0 0.0
    %581 = vmatpush1.msra.mxu0 0.0
    %582 = vmatprep.subr.mxu0 0.0
    %583 = vmatpush1.msra.mxu0 0.0
    %584 = vmatprep.subr.mxu0 0.0
    %585 = vmatpush1.msra.mxu0 0.0
    %586 = vmatprep.subr.mxu0 0.0
    %587 = vmatpush1.msra.mxu0 0.0
    %588 = vmatprep.subr.mxu0 0.0
    %589 = vmatpush1.msra.mxu0 0.0
    %590 = vmatprep.subr.mxu0 0.0
    %591 = vmatpush1.msra.mxu0 0.0
    %592 = vmatprep.subr.mxu0 0.0
    %593 = vmatpush1.msra.mxu0 0.0
    %594 = vmatprep.mubr.f32.mxu0 0.0
    %595 = vmatmul.mubr.f32.gmra.mrb[0].mxu0 %v525
    %v596 = vpop.f32.mrb[0].mxu0
    %v597 = vadd.f32 %v517, %v596
    %v598 = vpop.f32.mrb[0].mxu0
    %599 = vmatprep.mubr.f32.mxu0 0.0
    %600 = vmatmul.mubr.f32.gmra.mrb[0].mxu0 %v528
    %v601 = vpop.f32.mrb[0].mxu0
    %v602 = vadd.f32 %v522, %v601
    %v603 = vpop.f32.mrb[0].mxu0
    %604 = vdwg.mxu0
    %v605 = vadd.f32 %v393, %v597
    %v606 = vadd.f32 %v394, %v602
    %v607 = vmul.f32 %v605, %v391
    %v608 = vmul.f32 %v606, %v391
    %vm609 = vcmp.ge.s32.totalorder %v176, 4
    %610 = vrot.lane.b32.xlu0 %v607, 4
    %v611 = vpop.permute.xlu0 %610
    %612 = vrot.lane.b32.xlu0 %v608, 4
    %v613 = vpop.permute.xlu0 %612
    %v614 = vsel %vm609, %v611, 0.0
    %v615 = vsel %vm609, %v613, 0.0
    %vm616 = vcmp.lt.s32.totalorder %v176, 4
    %617 = vrot.lane.b32.xlu0 %v607, 124
    %v618 = vpop.permute.xlu0 %617
    %619 = vrot.lane.b32.xlu0 %v608, 124
    %v620 = vpop.permute.xlu0 %619
    %v621 = vsel %vm616, %v618, 0.0
    %v622 = vsel %vm616, %v620, 0.0
    %s623 = scalar_lea.vmem %s4, 32
    %v624 = vld [vmem:[%s623] sm:$0xff]
    %v625 = vld [vmem:[%s623 + $0x8] sm:$0xff]
    %s626 = scalar_lea.vmem %s5, 32
    %v627 = vld [vmem:[%s626] sm:$0xff]
    %v628 = vld [vmem:[%s626 + $0x8] sm:$0xff]
    %630 = vset.pattern.permute.xlu0 0
    %631 = vperm.xlu0 %630, %v627
    %v632 = vpop.permute.xlu0 %631
    %635 = vset.pattern.permute.xlu0 0
    %636 = vperm.xlu0 %635, %v628
    %v637 = vpop.permute.xlu0 %636
    %v640 = vsel %vm205, %v624, 0
    %v643 = vsel %vm205, %v625, 0
    %645 = vmatprep.subr.mxu0 0.0
    %646 = vmatpush1.msra.mxu0 %v614
    %647 = vmatprep.subr.mxu0 0.0
    %648 = vmatpush1.msra.mxu0 %v615
    %649 = vmatprep.subr.mxu0 0.0
    %650 = vmatpush1.msra.mxu0 %v607
    %651 = vmatprep.subr.mxu0 0.0
    %652 = vmatpush1.msra.mxu0 %v608
    %653 = vmatprep.subr.mxu0 0.0
    %654 = vmatpush1.msra.mxu0 %v621
    %655 = vmatprep.subr.mxu0 0.0
    %656 = vmatpush1.msra.mxu0 %v622
    %657 = vmatprep.subr.mxu0 0.0
    %658 = vmatpush1.msra.mxu0 0.0
    %659 = vmatprep.subr.mxu0 0.0
    %660 = vmatpush1.msra.mxu0 0.0
    %661 = vmatprep.subr.mxu0 0.0
    %662 = vmatpush1.msra.mxu0 0.0
    %663 = vmatprep.subr.mxu0 0.0
    %664 = vmatpush1.msra.mxu0 0.0
    %665 = vmatprep.subr.mxu0 0.0
    %666 = vmatpush1.msra.mxu0 0.0
    %667 = vmatprep.subr.mxu0 0.0
    %668 = vmatpush1.msra.mxu0 0.0
    %669 = vmatprep.subr.mxu0 0.0
    %670 = vmatpush1.msra.mxu0 0.0
    %671 = vmatprep.subr.mxu0 0.0
    %672 = vmatpush1.msra.mxu0 0.0
    %673 = vmatprep.subr.mxu0 0.0
    %674 = vmatpush1.msra.mxu0 0.0
    %675 = vmatprep.subr.mxu0 0.0
    %676 = vmatpush1.msra.mxu0 0.0
    %677 = vmatprep.subr.mxu0 0.0
    %678 = vmatpush1.msra.mxu0 0.0
    %679 = vmatprep.subr.mxu0 0.0
    %680 = vmatpush1.msra.mxu0 0.0
    %681 = vmatprep.subr.mxu0 0.0
    %682 = vmatpush1.msra.mxu0 0.0
    %683 = vmatprep.subr.mxu0 0.0
    %684 = vmatpush1.msra.mxu0 0.0
    %685 = vmatprep.subr.mxu0 0.0
    %686 = vmatpush1.msra.mxu0 0.0
    %687 = vmatprep.subr.mxu0 0.0
    %688 = vmatpush1.msra.mxu0 0.0
    %689 = vmatprep.subr.mxu0 0.0
    %690 = vmatpush1.msra.mxu0 0.0
    %691 = vmatprep.subr.mxu0 0.0
    %692 = vmatpush1.msra.mxu0 0.0
    %693 = vmatprep.subr.mxu0 0.0
    %694 = vmatpush1.msra.mxu0 0.0
    %695 = vmatprep.subr.mxu0 0.0
    %696 = vmatpush1.msra.mxu0 0.0
    %697 = vmatprep.subr.mxu0 0.0
    %698 = vmatpush1.msra.mxu0 0.0
    %699 = vmatprep.subr.mxu0 0.0
    %700 = vmatpush1.msra.mxu0 0.0
    %701 = vmatprep.subr.mxu0 0.0
    %702 = vmatpush1.msra.mxu0 0.0
    %703 = vmatprep.subr.mxu0 0.0
    %704 = vmatpush1.msra.mxu0 0.0
    %705 = vmatprep.subr.mxu0 0.0
    %706 = vmatpush1.msra.mxu0 0.0
    %707 = vmatprep.subr.mxu0 0.0
    %708 = vmatpush1.msra.mxu0 0.0
    %709 = vmatprep.mubr.f32.mxu0 0.0
    %710 = vmatmul.mubr.f32.gmra.mrb[0].mxu0 %v640
    %v711 = vpop.f32.mrb[0].mxu0
    %v712 = vadd.f32 %v632, %v711
    %v713 = vpop.f32.mrb[0].mxu0
    %714 = vmatprep.mubr.f32.mxu0 0.0
    %715 = vmatmul.mubr.f32.gmra.mrb[0].mxu0 %v643
    %v716 = vpop.f32.mrb[0].mxu0
    %v717 = vadd.f32 %v637, %v716
    %v718 = vpop.f32.mrb[0].mxu0
    %719 = vdwg.mxu0
    %v720 = vmax.f32 %v712, 0.0
    %v721 = vmax.f32 %v717, 0.0
    %s722 = scalar_lea.vmem %s6, 32
    %v723 = vld [vmem:[%s722] sm:$0xff]
    %v724 = vld [vmem:[%s722 + $0x8] sm:$0xff]
    %s725 = scalar_lea.vmem %s7, 32
    %v726 = vld [vmem:[%s725] sm:$0xff]
    %v727 = vld [vmem:[%s725 + $0x8] sm:$0xff]
    %729 = vset.pattern.permute.xlu0 0
    %730 = vperm.xlu0 %729, %v726
    %v731 = vpop.permute.xlu0 %730
    %734 = vset.pattern.permute.xlu0 0
    %735 = vperm.xlu0 %734, %v727
    %v736 = vpop.permute.xlu0 %735
    %v739 = vsel %vm303, %v723, 0
    %v742 = vsel %vm303, %v724, 0
    %744 = vmatprep.subr.mxu0 0.0
    %745 = vmatpush1.msra.mxu0 %v720
    %746 = vmatprep.subr.mxu0 0.0
    %747 = vmatpush1.msra.mxu0 %v721
    %748 = vmatprep.subr.mxu0 0.0
    %749 = vmatpush1.msra.mxu0 0.0
    %750 = vmatprep.subr.mxu0 0.0
    %751 = vmatpush1.msra.mxu0 0.0
    %752 = vmatprep.subr.mxu0 0.0
    %753 = vmatpush1.msra.mxu0 0.0
    %754 = vmatprep.subr.mxu0 0.0
    %755 = vmatpush1.msra.mxu0 0.0
    %756 = vmatprep.subr.mxu0 0.0
    %757 = vmatpush1.msra.mxu0 0.0
    %758 = vmatprep.subr.mxu0 0.0
    %759 = vmatpush1.msra.mxu0 0.0
    %760 = vmatprep.subr.mxu0 0.0
    %761 = vmatpush1.msra.mxu0 0.0
    %762 = vmatprep.subr.mxu0 0.0
    %763 = vmatpush1.msra.mxu0 0.0
    %764 = vmatprep.subr.mxu0 0.0
    %765 = vmatpush1.msra.mxu0 0.0
    %766 = vmatprep.subr.mxu0 0.0
    %767 = vmatpush1.msra.mxu0 0.0
    %768 = vmatprep.subr.mxu0 0.0
    %769 = vmatpush1.msra.mxu0 0.0
    %770 = vmatprep.subr.mxu0 0.0
    %771 = vmatpush1.msra.mxu0 0.0
    %772 = vmatprep.subr.mxu0 0.0
    %773 = vmatpush1.msra.mxu0 0.0
    %774 = vmatprep.subr.mxu0 0.0
    %775 = vmatpush1.msra.mxu0 0.0
    %776 = vmatprep.subr.mxu0 0.0
    %777 = vmatpush1.msra.mxu0 0.0
    %778 = vmatprep.subr.mxu0 0.0
    %779 = vmatpush1.msra.mxu0 0.0
    %780 = vmatprep.subr.mxu0 0.0
    %781 = vmatpush1.msra.mxu0 0.0
    %782 = vmatprep.subr.mxu0 0.0
    %783 = vmatpush1.msra.mxu0 0.0
    %784 = vmatprep.subr.mxu0 0.0
    %785 = vmatpush1.msra.mxu0 0.0
    %786 = vmatprep.subr.mxu0 0.0
    %787 = vmatpush1.msra.mxu0 0.0
    %788 = vmatprep.subr.mxu0 0.0
    %789 = vmatpush1.msra.mxu0 0.0
    %790 = vmatprep.subr.mxu0 0.0
    %791 = vmatpush1.msra.mxu0 0.0
    %792 = vmatprep.subr.mxu0 0.0
    %793 = vmatpush1.msra.mxu0 0.0
    %794 = vmatprep.subr.mxu0 0.0
    %795 = vmatpush1.msra.mxu0 0.0
    %796 = vmatprep.subr.mxu0 0.0
    %797 = vmatpush1.msra.mxu0 0.0
    %798 = vmatprep.subr.mxu0 0.0
    %799 = vmatpush1.msra.mxu0 0.0
    %800 = vmatprep.subr.mxu0 0.0
    %801 = vmatpush1.msra.mxu0 0.0
    %802 = vmatprep.subr.mxu0 0.0
    %803 = vmatpush1.msra.mxu0 0.0
    %804 = vmatprep.subr.mxu0 0.0
    %805 = vmatpush1.msra.mxu0 0.0
    %806 = vmatprep.subr.mxu0 0.0
    %807 = vmatpush1.msra.mxu0 0.0
    %808 = vmatprep.mubr.f32.mxu0 0.0
    %809 = vmatmul.mubr.f32.gmra.mrb[0].mxu0 %v739
    %v810 = vpop.f32.mrb[0].mxu0
    %v811 = vadd.f32 %v731, %v810
    %v812 = vpop.f32.mrb[0].mxu0
    %813 = vmatprep.mubr.f32.mxu0 0.0
    %814 = vmatmul.mubr.f32.gmra.mrb[0].mxu0 %v742
    %v815 = vpop.f32.mrb[0].mxu0
    %v816 = vadd.f32 %v736, %v815
    %v817 = vpop.f32.mrb[0].mxu0
    %818 = vdwg.mxu0
    %v819 = vadd.f32 %v607, %v811
    %v820 = vadd.f32 %v608, %v816
    %v821 = vmul.f32 %v819, %v391
    %v822 = vmul.f32 %v820, %v391
    %v823 = vld [vmem:[%s8] sm:$0xff]
    %v824 = vld [vmem:[%s9] sm:$0xff]
    %826 = vset.pattern.permute.xlu0 0
    %827 = vperm.xlu0 %826, %v824
    %v828 = vpop.permute.xlu0 %827
    %v831 = vsel %vm303, %v823, 0
    %833 = vmatprep.subr.mxu0 0.0
    %834 = vmatpush1.msra.mxu0 %v821
    %835 = vmatprep.subr.mxu0 0.0
    %836 = vmatpush1.msra.mxu0 %v822
    %837 = vmatprep.subr.mxu0 0.0
    %838 = vmatpush1.msra.mxu0 0.0
    %839 = vmatprep.subr.mxu0 0.0
    %840 = vmatpush1.msra.mxu0 0.0
    %841 = vmatprep.subr.mxu0 0.0
    %842 = vmatpush1.msra.mxu0 0.0
    %843 = vmatprep.subr.mxu0 0.0
    %844 = vmatpush1.msra.mxu0 0.0
    %845 = vmatprep.subr.mxu0 0.0
    %846 = vmatpush1.msra.mxu0 0.0
    %847 = vmatprep.subr.mxu0 0.0
    %848 = vmatpush1.msra.mxu0 0.0
    %849 = vmatprep.subr.mxu0 0.0
    %850 = vmatpush1.msra.mxu0 0.0
    %851 = vmatprep.subr.mxu0 0.0
    %852 = vmatpush1.msra.mxu0 0.0
    %853 = vmatprep.subr.mxu0 0.0
    %854 = vmatpush1.msra.mxu0 0.0
    %855 = vmatprep.subr.mxu0 0.0
    %856 = vmatpush1.msra.mxu0 0.0
    %857 = vmatprep.subr.mxu0 0.0
    %858 = vmatpush1.msra.mxu0 0.0
    %859 = vmatprep.subr.mxu0 0.0
    %860 = vmatpush1.msra.mxu0 0.0
    %861 = vmatprep.subr.mxu0 0.0
    %862 = vmatpush1.msra.mxu0 0.0
    %863 = vmatprep.subr.mxu0 0.0
    %864 = vmatpush1.msra.mxu0 0.0
    %865 = vmatprep.subr.mxu0 0.0
    %866 = vmatpush1.msra.mxu0 0.0
    %867 = vmatprep.subr.mxu0 0.0
    %868 = vmatpush1.msra.mxu0 0.0
    %869 = vmatprep.subr.mxu0 0.0
    %870 = vmatpush1.msra.mxu0 0.0
    %871 = vmatprep.subr.mxu0 0.0
    %872 = vmatpush1.msra.mxu0 0.0
    %873 = vmatprep.subr.mxu0 0.0
    %874 = vmatpush1.msra.mxu0 0.0
    %875 = vmatprep.subr.mxu0 0.0
    %876 = vmatpush1.msra.mxu0 0.0
    %877 = vmatprep.subr.mxu0 0.0
    %878 = vmatpush1.msra.mxu0 0.0
    %879 = vmatprep.subr.mxu0 0.0
    %880 = vmatpush1.msra.mxu0 0.0
    %881 = vmatprep.subr.mxu0 0.0
    %882 = vmatpush1.msra.mxu0 0.0
    %883 = vmatprep.subr.mxu0 0.0
    %884 = vmatpush1.msra.mxu0 0.0
    %885 = vmatprep.subr.mxu0 0.0
    %886 = vmatpush1.msra.mxu0 0.0
    %887 = vmatprep.subr.mxu0 0.0
    %888 = vmatpush1.msra.mxu0 0.0
    %889 = vmatprep.subr.mxu0 0.0
    %890 = vmatpush1.msra.mxu0 0.0
    %891 = vmatprep.subr.mxu0 0.0
    %892 = vmatpush1.msra.mxu0 0.0
    %893 = vmatprep.subr.mxu0 0.0
    %894 = vmatpush1.msra.mxu0 0.0
    %895 = vmatprep.subr.mxu0 0.0
    %896 = vmatpush1.msra.mxu0 0.0
    %897 = vmatprep.mubr.f32.mxu0 0.0
    %898 = vmatmul.mubr.f32.gmra.mrb[0].mxu0 %v831
    %v899 = vpop.f32.mrb[0].mxu0
    %v900 = vadd.f32 %v828, %v899
    %v901 = vpop.f32.mrb[0].mxu0
    %902 = vdwg.mxu0
    %v903 = vmul.f32 %v900, %v391
    %904 = vst [vmem:[#allocation7] sm:$0xff] %v903
    // Predicated region
    $region50: #{tpu_custom_call.1} parent=1 // pred_check
      _
    $region51: #{tpu_custom_call.1} parent=1 // pred_check_branch
      %906 = sbr.rel (0) target = $region53
    $region52: #{tpu_custom_call.1} parent=1 // pred_region
      %s908 = ssub.s32 128, 128
      %909 = vsyncadd [#allocation4], %s908
      %s911 = sshll.u32 [#allocation7], 4
      %s912 = int_to_ptr.vmem [resolvable:$true] %s911
      %914 = dma.vmem_to_hbm [thread:$0]  %s912, 128, %s10, [#allocation4]
    $region53: #{tpu_custom_call.1} parent=1 // pred_fallthru
      _
    // Predicated region
    $region54: #{tpu_custom_call.1} parent=1 // pred_check
      _
    $region55: #{tpu_custom_call.1} parent=1 // pred_check_branch
      %916 = sbr.rel (0) target = $region57
    $region56: #{tpu_custom_call.1} parent=1 // pred_region
      %917 = dma.done [#allocation4], 128
    $region57: #{tpu_custom_call.1} parent=1 // pred_fallthru
      _
    %918 = vsyncpa [#allocation3], 1
    %919 = vsyncpa [#allocation6], 1
    %920 = vsyncpa [#allocation4], 1

</llo_original>
